<compile_context>
chip_gen: v6e
topology: v6e:2x2x1
jax: 0.10.0
libtpu: 0.0.40
codegen_flags: <defaults>
</compile_context>

<pallas_src>
import functools

import jax
import jax.numpy as jnp
from jax import lax
from jax.experimental import pallas as pl
from jax.experimental.pallas import tpu as pltpu


# ---------------------------------------------------------------------------
# Sizing helpers (generation-aware VMEM budget, lane-density, block sizes)
# ---------------------------------------------------------------------------

def _cdiv(a, b):
    return -(-a // b)


@functools.lru_cache(maxsize=None)
def _vmem_budget():
    """(per-step big-block byte budget, scoped vmem_limit_bytes), generation aware."""
    vmem = 64 << 20                                   # conservative default (v7x per-TC)
    try:
        vmem = int(getattr(pltpu.get_tpu_info(), "vmem_capacity_bytes", vmem))
    except Exception:
        pass
    if vmem >= (96 << 20):                            # v5e / v6e: 128 MiB physical VMEM
        return 24 << 20, 64 << 20
    return 10 << 20, 32 << 20                         # v7x: 64 MiB per TensorCore


def _compiler_params():
    _, vmem_limit = _vmem_budget()
    return pltpu.CompilerParams(
        dimension_semantics=("parallel",),            # independent row / batch blocks
        vmem_limit_bytes=vmem_limit,
    )


def _lane_util(width):
    return width / (_cdiv(width, 128) * 128)


def _pick_group(hw, c, max_width=1024):
    """Smallest divisor g of HW such that g*C fills 128-lane vregs well."""
    best_g, best_util = 1, 0.0
    for g in range(1, hw + 1):
        if hw % g:
            continue
        gc = g * c
        if gc > max_width and best_util > 0.0:
            break
        util = _lane_util(gc)
        if util > best_util + 1e-9:
            best_g, best_util = g, util
        if util >= 1.0 - 1e-9:
            break
    return best_g


def _pick_lane_width(n_pix, c, max_width=2048):
    """Lane width k*C (k | n_pix) that fills 128-lane vregs; falls back to C."""
    best_k, best_util = 1, 0.0
    for k in range(1, n_pix + 1):
        if n_pix % k:
            continue
        lane = k * c
        if lane > max_width and best_util > 0.0:
            break
        util = _lane_util(lane)
        if util > best_util + 1e-9:
            best_k, best_util = k, util
        if util >= 1.0 - 1e-9:
            break
    return best_k * c


def _pick_block_rows(rows, width, itemsize, *, n_big, min_steps=4):
    """Rows per block: fits the double-buffered VMEM budget, keeps >= min_steps grid
    steps for pipelining, and respects the (8, 128) block-shape constraint."""
    budget, _ = _vmem_budget()
    per_row = n_big * 2 * width * itemsize            # 2x: double buffering
    blk = min(rows, max(1, budget // max(per_row, 1)), max(1, _cdiv(rows, min_steps)))
    if blk >= rows or rows < 8:
        return rows
    return max(8, (blk // 8) * 8)


def _pick_blk_b(batch, elems_per_image, itemsize, *, n_big, min_steps=4):
    """Images per block (leading dim -> no (8,128) constraint)."""
    budget, _ = _vmem_budget()
    per_image = n_big * 2 * elems_per_image * itemsize
    return max(1, min(batch, budget // max(per_image, 1), _cdiv(batch, min_steps)))


# ---------------------------------------------------------------------------
# Kernel 1: per-channel affine (folded BatchNorm) + PReLU (alpha == 1 -> plain BN)
# ---------------------------------------------------------------------------

def _affine_prelu_kernel(x_ref, p_ref, o_ref):
    # x_ref / o_ref: (blk_rows, L) with L a multiple of C (lane-dense when possible).
    # p_ref: (3, L) = [scale; shift; alpha], channel-tiled to width L, f32.
    x = x_ref[...].astype(jnp.float32)
    scale = p_ref[0:1, :]
    shift = p_ref[1:2, :]
    alpha = p_ref[2:3, :]
    y = x * scale + shift
    o_ref[...] = jnp.where(y > 0, y, alpha * y).astype(o_ref.dtype)


def _affine_prelu(x_bhwc, scale, shift, alpha):
    b, h, w, c = x_bhwc.shape
    n_pix = b * h * w
    lane = _pick_lane_width(n_pix, c)                 # multiple of C, lane-dense
    rows = (n_pix * c) // lane
    x2 = x_bhwc.reshape(rows, lane)                   # contiguous -> free reshape

    reps = lane // c
    params = jnp.stack(
        [jnp.tile(scale.astype(jnp.float32), reps),
         jnp.tile(shift.astype(jnp.float32), reps),
         jnp.tile(alpha.astype(jnp.float32), reps)], axis=0)          # (3, L)

    blk_rows = _pick_block_rows(rows, lane, x2.dtype.itemsize, n_big=2)
    grid = _cdiv(rows, blk_rows)                      # partial tail block is masked

    out = pl.pallas_call(
        _affine_prelu_kernel,
        out_shape=jax.ShapeDtypeStruct((rows, lane), x2.dtype),
        grid_spec=pltpu.PrefetchScalarGridSpec(
            num_scalar_prefetch=0,
            grid=(grid,),
            in_specs=[
                pl.BlockSpec((blk_rows, lane), lambda i: (i, 0)),
                pl.BlockSpec((3, lane), lambda i: (0, 0)),
            ],
            out_specs=pl.BlockSpec((blk_rows, lane), lambda i: (i, 0)),
        ),
        compiler_params=_compiler_params(),
    )(x2, params)
    return out.reshape(b, h, w, c)


# ---------------------------------------------------------------------------
# Kernel 2: fused BatchNorm3 + SE (squeeze/excite/scale) + shortcut affine + add
# ---------------------------------------------------------------------------

def _bn_se_residual_kernel(r_ref, s_ref, p_ref, w1t_ref, w2t_ref, o_ref,
                           *, groups, channels, inv_hw):
    # r_ref (conv2 output), s_ref (shortcut), o_ref: (blk_b, HW/g, g*C), lane-dense.
    # p_ref: (4, g*C) = [bn3_scale; bn3_shift; sc_scale; sc_shift], f32.
    # w1t: (C, C_red), w2t: (C_red, C) SE weights, pre-transposed in the wrapper.
    r = r_ref[...].astype(jnp.float32)
    s = s_ref[...].astype(jnp.float32)
    p = p_ref[...]
    y = r * p[0] + p[1]                               # BN3 (inference affine), f32
    shortcut = s * p[2] + p[3]                        # shortcut BN / identity

    # Squeeze: global average pool over HW as a ones-vector batched matmul, so the
    # reduction runs on the otherwise-idle MXU instead of the XLU critical path.
    blk_b, hw_g, gc = y.shape
    ones_row = jnp.ones((blk_b, 1, hw_g), jnp.float32)
    pooled_g = jnp.einsum("boh,bhc->boc", ones_row, y,
                          preferred_element_type=jnp.float32)[:, 0, :]   # (blk_b, g*C)
    pooled = pooled_g[:, :channels]
    for grp in range(1, groups):                      # fold the g channel groups back
        pooled = pooled + pooled_g[:, grp * channels:(grp + 1) * channels]
    pooled = pooled * inv_hw                          # 1/HW is a compile-time constant

    # Excitation: fc1 -> relu -> fc2 -> sigmoid (tiny O(blk_b*C) work, f32).
    hidden = jnp.maximum(
        jnp.dot(pooled, w1t_ref[...], preferred_element_type=jnp.float32), 0.0)
    logits = jnp.dot(hidden, w2t_ref[...], preferred_element_type=jnp.float32)
    gate = pl.reciprocal(1.0 + jnp.exp(-logits), approx=False)        # exact sigmoid
    if groups > 1:
        gate = jnp.concatenate([gate] * groups, axis=-1)              # (blk_b, g*C)

    # SE scaling + residual add over the resident tile, one fused lane-dense store.
    o_ref[...] = (shortcut + y * gate[:, None, :]).astype(o_ref.dtype)


def _bn_se_residual(res_bhwc, shortcut_bhwc, bn_scale, bn_shift,
                    sc_scale, sc_shift, w1, w2):
    """out = (shortcut*sc_scale + sc_shift) + BN3(res) * sigmoid(fc2(relu(fc1(pool))))."""
    b, h, w, c = res_bhwc.shape
    hw = h * w
    dt = res_bhwc.dtype

    g = _pick_group(hw, c)                            # lane-density regrouping factor
    gc = g * c
    hw_g = hw // g
    r = res_bhwc.reshape(b, hw_g, gc)                 # contiguous -> free reshape
    s = shortcut_bhwc.reshape(b, hw_g, gc)

    params = jnp.stack(
        [jnp.tile(bn_scale.astype(jnp.float32), g),
         jnp.tile(bn_shift.astype(jnp.float32), g),
         jnp.tile(sc_scale.astype(jnp.float32), g),
         jnp.tile(sc_shift.astype(jnp.float32), g)], axis=0)          # (4, g*C)

    # Pre-transpose SE weights at trace time -> no in-kernel XLU transpose.
    w1t = jnp.asarray(w1, jnp.float32).T              # (C, C_red)
    w2t = jnp.asarray(w2, jnp.float32).T              # (C_red, C)
    c_red = w1t.shape[1]

    blk_b = _pick_blk_b(b, hw_g * gc, dt.itemsize, n_big=3)  # r + s + out streams
    grid = _cdiv(b, blk_b)

    kernel = functools.partial(_bn_se_residual_kernel,
                               groups=g, channels=c, inv_hw=1.0 / hw)
    out = pl.pallas_call(
        kernel,
        out_shape=jax.ShapeDtypeStruct((b, hw_g, gc), dt),
        grid_spec=pltpu.PrefetchScalarGridSpec(
            num_scalar_prefetch=0,
            grid=(grid,),
            in_specs=[
                pl.BlockSpec((blk_b, hw_g, gc), lambda i: (i, 0, 0)),
                pl.BlockSpec((blk_b, hw_g, gc), lambda i: (i, 0, 0)),
                pl.BlockSpec((4, gc), lambda i: (0, 0)),
                pl.BlockSpec((c, c_red), lambda i: (0, 0)),
                pl.BlockSpec((c_red, c), lambda i: (0, 0)),
            ],
            out_specs=pl.BlockSpec((blk_b, hw_g, gc), lambda i: (i, 0, 0)),
        ),
        compiler_params=_compiler_params(),
    )(r, s, params, w1t, w2t)
    return out.reshape(b, h, w, c)


# ---------------------------------------------------------------------------
# Full BottleNeck_IR_SE forward (NCHW in / NCHW out, like the PyTorch module)
# ---------------------------------------------------------------------------

def _bn_fold(gamma, beta, mean, var, eps=1e-5):
    """Fold inference BatchNorm into per-channel (scale, shift)."""
    scale = gamma * lax.rsqrt(var + eps)
    return scale, beta - mean * scale


def _conv2d_nhwc(x_bhwc, w_oihw, *, stride):
    """PyTorch-style conv (OIHW weights, padding=kernel//2, no bias), NHWC layout."""
    kh, kw = int(w_oihw.shape[2]), int(w_oihw.shape[3])
    w_hwio = jnp.transpose(w_oihw, (2, 3, 1, 0))
    return lax.conv_general_dilated(
        x_bhwc, w_hwio, window_strides=(stride, stride),
        padding=((kh // 2, kh // 2), (kw // 2, kw // 2)),
        dimension_numbers=("NHWC", "HWIO", "NHWC"),
        precision=lax.Precision.HIGHEST)


def bottleneck_ir_se_nhwc(x_nhwc, params, *, stride, dim_match):
    """BottleNeck_IR_SE forward in NHWC (channels on the lane axis)."""
    cin = x_nhwc.shape[-1]
    cout = params["conv1_w"].shape[0]

    bn1_s, bn1_b = _bn_fold(*params["bn1"])
    bn2_s, bn2_b = _bn_fold(*params["bn2"])
    bn3_s, bn3_b = _bn_fold(*params["bn3"])

    # --- residual branch -----------------------------------------------------
    # TODO(synk): BN1 / BN2+PReLU as standalone Pallas kernels cost one activation
    # HBM round trip each; letting XLA fuse them into the conv is a possible swap.
    y = _affine_prelu(x_nhwc, bn1_s, bn1_b, jnp.ones((cin,), jnp.float32))  # BN1
    y = _conv2d_nhwc(y, params["conv1_w"], stride=1)                        # 3x3 / 1
    y = _affine_prelu(y, bn2_s, bn2_b, params["prelu_alpha"])               # BN2+PReLU
    y = _conv2d_nhwc(y, params["conv2_w"], stride=stride)                   # 3x3 / s

    # --- shortcut branch -------------------------------------------------------
    if dim_match:
        shortcut = x_nhwc
        sc_scale = jnp.ones((cout,), jnp.float32)
        sc_shift = jnp.zeros((cout,), jnp.float32)
    else:
        shortcut = _conv2d_nhwc(x_nhwc, params["sc_w"], stride=stride)      # 1x1 / s
        sc_scale, sc_shift = _bn_fold(*params["bn_sc"])
    assert shortcut.shape == y.shape, "shortcut / residual shape mismatch"

    # --- fused BN3 + SE + shortcut affine + residual add -----------------------
    return _bn_se_residual(y, shortcut, bn3_s, bn3_b, sc_scale, sc_shift,
                           params["se_w1"], params["se_w2"])


def bottleneck_ir_se(x_nchw, params, *, stride, dim_match):
    # TODO(synk): hoist these two full-tensor transposes to the model edges when
    # stacking blocks; kept here only for PyTorch NCHW parity.
    x = jnp.transpose(x_nchw, (0, 2, 3, 1))
    out = bottleneck_ir_se_nhwc(x, params, stride=stride, dim_match=dim_match)
    return jnp.transpose(out, (0, 3, 1, 2))


# ---------------------------------------------------------------------------
# Pure-JAX reference (independent NCHW formulation) and parameter creation
# ---------------------------------------------------------------------------

def _reference(x_nchw, params, *, stride, dim_match):
    def bn(x, gamma, beta, mean, var, eps=1e-5):
        inv = lax.rsqrt(var + eps)
        return (gamma * inv)[None, :, None, None] * (x - mean[None, :, None, None]) \
               + beta[None, :, None, None]

    def conv(x, w_oihw, s):
        kh, kw = int(w_oihw.shape[2]), int(w_oihw.shape[3])
        return lax.conv_general_dilated(
            x, w_oihw, (s, s), ((kh // 2, kh // 2), (kw // 2, kw // 2)),
            dimension_numbers=("NCHW", "OIHW", "NCHW"),
            precision=lax.Precision.HIGHEST)

    y = bn(x_nchw, *params["bn1"])
    y = conv(y, params["conv1_w"], 1)
    y = bn(y, *params["bn2"])
    a = params["prelu_alpha"][None, :, None, None]
    y = jnp.where(y > 0, y, a * y)
    y = conv(y, params["conv2_w"], stride)
    y = bn(y, *params["bn3"])
    pooled = jnp.mean(y, axis=(2, 3))
    hidden = jnp.maximum(pooled @ params["se_w1"].T, 0.0)
    gate = jax.nn.sigmoid(hidden @ params["se_w2"].T)
    res = y * gate[:, :, None, None]
    if dim_match:
        shortcut = x_nchw
    else:
        shortcut = conv(x_nchw, params["sc_w"], stride)
        shortcut = bn(shortcut, *params["bn_sc"])
    return shortcut + res


def make_params(key, cin, cout, dim_match, reduction=16):
    ks = jax.random.split(key, 10)

    def bn_params(k, c):
        k1, k2, k3, k4 = jax.random.split(k, 4)
        gamma = 1.0 + 0.1 * jax.random.normal(k1, (c,), jnp.float32)
        beta = 0.1 * jax.random.normal(k2, (c,), jnp.float32)
        mean = 0.1 * jax.random.normal(k3, (c,), jnp.float32)
        var = jax.random.uniform(k4, (c,), jnp.float32, minval=0.5, maxval=1.5)
        return (gamma, beta, mean, var)

    params = {
        "bn1": bn_params(ks[0], cin),
        "conv1_w": 0.05 * jax.random.normal(ks[1], (cout, cin, 3, 3), jnp.float32),
        "bn2": bn_params(ks[2], cout),
        "prelu_alpha": 0.25 + 0.05 * jax.random.normal(ks[3], (cout,), jnp.float32),
        "conv2_w": 0.05 * jax.random.normal(ks[4], (cout, cout, 3, 3), jnp.float32),
        "bn3": bn_params(ks[5], cout),
        "se_w1": 0.1 * jax.random.normal(ks[6], (cout // reduction, cout), jnp.float32),
        "se_w2": 0.1 * jax.random.normal(ks[7], (cout, cout // reduction), jnp.float32),
    }
    if not dim_match:
        params["sc_w"] = 0.1 * jax.random.normal(ks[8], (cout, cin, 1, 1), jnp.float32)
        params["bn_sc"] = bn_params(ks[9], cout)
    return params


if __name__ == "__main__":
    jax.config.update("jax_default_matmul_precision", "highest")
    key = jax.random.PRNGKey(0)
    kx, kp1, kp2 = jax.random.split(key, 3)

    B, Cin, H, W = 2, 32, 14, 14            # reduction=16 -> channels must be >= 16
    x = jax.random.normal(kx, (B, Cin, H, W), dtype=jnp.float32)

    # Config 1: identity shortcut (dim_match=True, stride 1, Cout == Cin).
    p1 = make_params(kp1, Cin, 32, dim_match=True)
    out1 = jax.block_until_ready(bottleneck_ir_se(x, p1, stride=1, dim_match=True))
    ref1 = _reference(x, p1, stride=1, dim_match=True)
    assert out1.shape == ref1.shape
    assert jnp.allclose(out1, ref1, atol=5e-4, rtol=5e-4), "dim_match config mismatch"

    # Config 2: 1x1-conv + BN shortcut (dim_match=False, stride 2, Cout != Cin).
    p2 = make_params(kp2, Cin, 64, dim_match=False)
    out2 = jax.block_until_ready(bottleneck_ir_se(x, p2, stride=2, dim_match=False))
    ref2 = _reference(x, p2, stride=2, dim_match=False)
    assert out2.shape == ref2.shape
    assert jnp.allclose(out2, ref2, atol=5e-4, rtol=5e-4), "downsample config mismatch"

    print("KERNEL_OK")
</pallas_src>

<mosaic_0001>
module attributes {stable_mosaic.version = 11 : i64} {
  func.func @_affine_prelu_kernel(%arg0: i32, %arg1: memref<24x128xf32, #tpu.memory_space<vmem>>, %arg2: memref<3x128xf32, #tpu.memory_space<vmem>>, %arg3: memref<24x128xf32, #tpu.memory_space<vmem>>) attributes {dimension_semantics = [#tpu.dimension_semantics<parallel>], iteration_bounds = array<i64: 5>, scalar_prefetch = 0 : i64, scratch_operands = 0 : i64, tpu.core_type = #tpu.core_type<tc>, window_params = [{transform_indices = @transform_0, window_bounds = array<i64: 24, 128>}, {pipeline_mode = #tpu.pipeline_mode<synchronous>, transform_indices = @transform_1, window_bounds = array<i64: 3, 128>}, {transform_indices = @transform_2, window_bounds = array<i64: 24, 128>}]} {
    %c0 = arith.constant 0 : index
    %c0_0 = arith.constant 0 : index
    %0 = vector.load %arg1[%c0, %c0_0] : memref<24x128xf32, #tpu.memory_space<vmem>>, vector<24x128xf32>
    %c0_1 = arith.constant 0 : index
    %c0_2 = arith.constant 0 : index
    %1 = vector.load %arg2[%c0_1, %c0_2] : memref<3x128xf32, #tpu.memory_space<vmem>>, vector<1x128xf32>
    %c1 = arith.constant 1 : index
    %c0_3 = arith.constant 0 : index
    %2 = vector.load %arg2[%c1, %c0_3] : memref<3x128xf32, #tpu.memory_space<vmem>>, vector<1x128xf32>
    %c2 = arith.constant 2 : index
    %c0_4 = arith.constant 0 : index
    %3 = vector.load %arg2[%c2, %c0_4] : memref<3x128xf32, #tpu.memory_space<vmem>>, vector<1x128xf32>
    %4 = vector.broadcast %1 : vector<1x128xf32> to vector<24x128xf32>
    %5 = arith.mulf %0, %4 : vector<24x128xf32>
    %6 = vector.broadcast %2 : vector<1x128xf32> to vector<24x128xf32>
    %7 = arith.addf %5, %6 : vector<24x128xf32>
    %cst = arith.constant 0.000000e+00 : f32
    %8 = vector.broadcast %cst : f32 to vector<24x128xf32>
    %9 = arith.cmpf ogt, %7, %8 : vector<24x128xf32>
    %10 = vector.broadcast %3 : vector<1x128xf32> to vector<24x128xf32>
    %11 = arith.mulf %10, %7 : vector<24x128xf32>
    %12 = arith.select %9, %7, %11 : vector<24x128xi1>, vector<24x128xf32>
    %c0_5 = arith.constant 0 : index
    %c0_6 = arith.constant 0 : index
    %13 = vector.load %arg3[%c0_5, %c0_6] : memref<24x128xf32, #tpu.memory_space<vmem>>, vector<24x128xf32>
    tpu.vector_store %arg3[%c0_5, %c0_6], %12 {strides = array<i32>} : memref<24x128xf32, #tpu.memory_space<vmem>>, vector<24x128xf32>,
    return
  }
  func.func @transform_0(%arg0: i32) -> (i32, i32) {
    %c0_i32 = arith.constant 0 : i32
    %c0_i32_0 = arith.constant 0 : i32
    return %arg0, %c0_i32 : i32, i32
  }
  func.func @transform_1(%arg0: i32) -> (i32, i32) {
    %c0_i32 = arith.constant 0 : i32
    %c0_i32_0 = arith.constant 0 : i32
    %c0_i32_1 = arith.constant 0 : i32
    return %c0_i32, %c0_i32_0 : i32, i32
  }
  func.func @transform_2(%arg0: i32) -> (i32, i32) {
    %c0_i32 = arith.constant 0 : i32
    %c0_i32_0 = arith.constant 0 : i32
    return %arg0, %c0_i32 : i32, i32
  }
}

</mosaic_0001>

<llo_original>
// kernel: tpu_custom_call.1
$region0: #{tpu_custom_call.1}
  #allocation0 [shape = 'u32[]', space=smem, size = 0x4, offset = 0x4, fixed_abs, tag = 'smem constant byte address 0x4 - core index']
  #allocation1 [shape = 'u32[144,128]{1,0:T(1,128)}', space=vmem, size = 0x12000, scoped, tag = 'internal scratch']
  %s0 = inlined_call_operand.hbm [shape: f32[98,128], index: 0, kind: input, shape index: {}]
  %s1 = inlined_call_operand.hbm [shape: f32[3,128], index: 1, kind: input, shape index: {}]
  %s2 = inlined_call_operand.hbm [shape: f32[98,128], index: 2, kind: output, shape index: {}]
  %s3 = sld [smem:[#allocation0]]
  $region49: #{tpu_custom_call.1} parent=0
    _
  %s5 = ssub.s32 1, %s3
  %s6 = scalar_select 0, %s5, %s3
  $region1: #{tpu_custom_call.1} parent=0
    #allocation2 [shape = 'u8[24576]{0}', space=vmem, size = 0x6000, scoped, tag = 'input window, operand 0']
    #allocation3 [shape = 's32[2]{0}', space=sflag, size = 0x8, scoped, tag = 'scoped memory for tpu_custom_call.1']
    #allocation4 [shape = 's32[2]{0}', space=sflag, size = 0x8, scoped, tag = 'scoped memory for tpu_custom_call.1']
    #allocation5 [shape = 'u8[2048]{0}', space=vmem, size = 0x800, scoped, tag = 'input window, operand 1, single buffered']
    #allocation6 [shape = 's32[1]{0}', space=sflag, size = 0x4, scoped, tag = 'scoped memory for tpu_custom_call.1']
    #allocation7 [shape = 'u8[24576]{0}', space=vmem, size = 0x6000, scoped, tag = 'output window, operand 0']
    %7 = vsyncpa [#allocation3], 0
    %s8 = scalar_lea.sflag [#allocation3], 1
    %9 = vsyncpa %s8, 0
    %10 = vsyncpa [#allocation6], 0
    %11 = vsyncpa [#allocation4], 0
    %s12 = scalar_lea.sflag [#allocation4], 1
    %13 = vsyncpa %s12, 0
    loop: start=0, step=1, limit=7
    $region2: #{tpu_custom_call.1} parent=1 // loop_pre_header
      _
    $region3: #{tpu_custom_call.1} parent=1 // loop_header
      %s15 = sphi 0, %s19
      %p16 = scmp.ge.s32.totalorder %s15, 7
      %s25 = sphi 0, %s27
      %s28 = sphi 0, %s25
      %s29 = sphi 0, %s28
      %s45 = sphi 0, %s29
      %s49 = sphi 0, %s49
      %s51 = sphi 0, %s49
      %s52 = sphi 0, %s51
      %s66 = sphi 0, %s52
      %s72 = sphi 0, %s74
      %s75 = sphi 0, %s72
      %s76 = sphi 0, %s75
      %s92 = sphi 0, %s76
    $region4: #{tpu_custom_call.1} parent=1 // loop_header_branch
      %18 = sbr.rel (%p16) target = $region8
    $region5: #{tpu_custom_call.1} parent=1 // loop_body
      %s20 = ssub.s32 %s15, 1
      %s21 = ssub.s32 %s15, 2
      %s22 = sadd.s32 %s15, 1
      %s23 = ssub.s32 %s15, %s22
      %p24 = scmp.eq.s32.totalorder %s23, 0
      %s26 = sadd.s32 %s25, 1
      %s27 = scalar_select %p24, %s25, %s26
      %p30 = pneg %p24
      %p31 = scmp.eq.s32.totalorder %s15, 4
      %p32 = por %p30, %p31
      %p33 = scmp.ne.s32.totalorder %s25, %s28
      %p34 = scmp.eq.s32.totalorder %s15, 0
      %p35 = por %p33, %p34
      %p36 = scmp.ne.s32.totalorder %s25, %s28
      %p37 = scmp.eq.s32.totalorder %s20, 4
      %p38 = por %p36, %p37
      %p39 = scmp.ne.s32.totalorder %s28, %s29
      %p40 = scmp.eq.s32.totalorder %s20, 0
      %p41 = por %p39, %p40
      %p42 = scmp.ne.s32.totalorder %s28, %s29
      %p43 = scmp.eq.s32.totalorder %s21, 4
      %p44 = por %p42, %p43
      %p46 = scmp.ne.s32.totalorder %s29, %s45
      %p47 = scmp.eq.s32.totalorder %s21, 0
      %p48 = por %p46, %p47
      %s50 = sadd.s32 %s49, 1
      %p53 = scmp.eq.s32.totalorder %s15, 4
      %p54 = scmp.ne.s32.totalorder %s49, %s51
      %p55 = scmp.eq.s32.totalorder %s15, 0
      %p56 = por %p54, %p55
      %p57 = scmp.ne.s32.totalorder %s49, %s51
      %p58 = scmp.eq.s32.totalorder %s20, 4
      %p59 = por %p57, %p58
      %p60 = scmp.ne.s32.totalorder %s51, %s52
      %p61 = scmp.eq.s32.totalorder %s20, 0
      %p62 = por %p60, %p61
      %p63 = scmp.ne.s32.totalorder %s51, %s52
      %p64 = scmp.eq.s32.totalorder %s21, 4
      %p65 = por %p63, %p64
      %p67 = scmp.ne.s32.totalorder %s52, %s66
      %p68 = scmp.eq.s32.totalorder %s21, 0
      %p69 = por %p67, %p68
      %s70 = ssub.s32 %s15, %s22
      %p71 = scmp.eq.s32.totalorder %s70, 0
      %s73 = sadd.s32 %s72, 1
      %s74 = scalar_select %p71, %s72, %s73
      %p77 = pneg %p71
      %p78 = scmp.eq.s32.totalorder %s15, 4
      %p79 = por %p77, %p78
      %p80 = scmp.ne.s32.totalorder %s72, %s75
      %p81 = scmp.eq.s32.totalorder %s15, 0
      %p82 = por %p80, %p81
      %p83 = scmp.ne.s32.totalorder %s72, %s75
      %p84 = scmp.eq.s32.totalorder %s20, 4
      %p85 = por %p83, %p84
      %p86 = scmp.ne.s32.totalorder %s75, %s76
      %p87 = scmp.eq.s32.totalorder %s20, 0
      %p88 = por %p86, %p87
      %p89 = scmp.ne.s32.totalorder %s75, %s76
      %p90 = scmp.eq.s32.totalorder %s21, 4
      %p91 = por %p89, %p90
      %p93 = scmp.ne.s32.totalorder %s76, %s92
      %p94 = scmp.eq.s32.totalorder %s21, 0
      %p95 = por %p93, %p94
      %p96 = scmp.le.s32.totalorder 1, %s15
      %p97 = scmp.lt.s32.totalorder %s15, 6
      %p98 = pnand %p96, %p97
      %p99 = pneg %p98
      // Predicated region
      $region9: #{tpu_custom_call.1} parent=5 // pred_check
        _
      $region10: #{tpu_custom_call.1} parent=5 // pred_check_branch
        %101 = sbr.rel (%p98) target = $region12
      $region11: #{tpu_custom_call.1} parent=5 // pred_region
        %s102 = ssub.s32 %s15, 1
        // Predicated region
        $region13: #{tpu_custom_call.1} parent=11 // pred_check
          %p103 = pneg %p62
        $region14: #{tpu_custom_call.1} parent=11 // pred_check_branch
          %105 = sbr.rel (%p103) target = $region16
        $region15: #{tpu_custom_call.1} parent=11 // pred_region
          %s107 = ssub.s32 64, 64
          %108 = vsyncadd [#allocation6], %s107
          %s110 = sshll.u32 [#allocation5], 4
          %s111 = int_to_ptr.vmem [resolvable:$true] %s110
          %113 = dma.hbm_to_vmem [thread:$0]  %s1, 64, %s111, [#allocation6]
        $region16: #{tpu_custom_call.1} parent=11 // pred_fallthru
          _
      $region12: #{tpu_custom_call.1} parent=5 // pred_fallthru
        _
      %p114 = scmp.lt.s32.totalorder %s15, 5
      // Predicated region
      $region17: #{tpu_custom_call.1} parent=5 // pred_check
        %p115 = pneg %p114
      $region18: #{tpu_custom_call.1} parent=5 // pred_check_branch
        %117 = sbr.rel (%p115) target = $region20
      $region19: #{tpu_custom_call.1} parent=5 // pred_region
        // Predicated region
        $region21: #{tpu_custom_call.1} parent=19 // pred_check
          %p118 = pneg %p35
        $region22: #{tpu_custom_call.1} parent=19 // pred_check_branch
          %120 = sbr.rel (%p118) target = $region24
        $region23: #{tpu_custom_call.1} parent=19 // pred_region
          %s121 = sand.u32 %s25, 1
          %s122 = scalar_lea.sflag [#allocation3], %s121
          %s123 = sand.u32 %s25, 1
          %s124 = smul.addr %s123, 24
          %s125 = scalar_lea.vmem [#allocation2], %s124
          %s126 = smul.u32 3, %s15
          %s127 = ssub.s32 13, %s126
          %p128 = scmp.lt.s32.totalorder %s127, 3
          %s129 = scalar_select %p128, %s127, 3
          %s130 = smul.u32 128, %s129
          %s132 = ssub.s32 384, %s130
          %133 = vsyncadd %s122, %s132
          %p134 = scmp.ne.s32.totalorder 0, %s130
          %s135 = smul.addr %s126, 128
          %s136 = scalar_lea.hbm %s0, %s135
          %s137 = smul.u32 8, %s129
          %s138 = sshll.u32 %s125, 4
          %s139 = int_to_ptr.vmem [resolvable:$true] %s138
          %s140 = sshll.u32 %s137, 4
          %144 = dma.hbm_to_vmem [thread:$0]  (%p134), %s136, %s140, %s139, %s122, 128, 128, 8
        $region24: #{tpu_custom_call.1} parent=19 // pred_fallthru
          _
      $region20: #{tpu_custom_call.1} parent=5 // pred_fallthru
        _
      %p145 = scmp.le.s32.totalorder 1, %s15
      %p146 = scmp.lt.s32.totalorder %s15, 6
      %p147 = pnand %p145, %p146
      %p148 = pneg %p147
      // Predicated region
      $region25: #{tpu_custom_call.1} parent=5 // pred_check
        _
      $region26: #{tpu_custom_call.1} parent=5 // pred_check_branch
        %150 = sbr.rel (%p147) target = $region28
      $region27: #{tpu_custom_call.1} parent=5 // pred_region
        %s151 = ssub.s32 %s15, 1
        %s152 = sand.u32 %s28, 1
        %s153 = scalar_lea.sflag [#allocation3], %s152
        %s154 = sand.u32 %s28, 1
        %s155 = smul.addr %s154, 24
        %s156 = scalar_lea.vmem [#allocation2], %s155
        // Predicated region
        $region29: #{tpu_custom_call.1} parent=27 // pred_check
          %p157 = pneg %p41
        $region30: #{tpu_custom_call.1} parent=27 // pred_check_branch
          %159 = sbr.rel (%p157) target = $region32
        $region31: #{tpu_custom_call.1} parent=27 // pred_region
          %160 = dma.done %s153, 384
        $region32: #{tpu_custom_call.1} parent=27 // pred_fallthru
          _
        // Predicated region
        $region33: #{tpu_custom_call.1} parent=27 // pred_check
          %p161 = pneg %p62
        $region34: #{tpu_custom_call.1} parent=27 // pred_check_branch
          %163 = sbr.rel (%p161) target = $region36
        $region35: #{tpu_custom_call.1} parent=27 // pred_region
          %164 = dma.done [#allocation6], 64
        $region36: #{tpu_custom_call.1} parent=27 // pred_fallthru
          _
        %s165 = sand.u32 %s28, 1
        %s166 = scalar_lea.sflag [#allocation3], %s165
        %s167 = sand.u32 %s28, 1
        %s168 = smul.addr %s167, 24
        %s169 = scalar_lea.vmem [#allocation2], %s168
        %p170 = pneg %p41
        %p171 = pneg %p38
        %p172 = pneg %p62
        %p173 = pneg %p59
        %p174 = pneg %p88
        %p175 = pneg %p85
        %s176 = sand.u32 %s75, 1
        %s177 = scalar_lea.sflag [#allocation4], %s176
        %s178 = sand.u32 %s75, 1
        %s179 = smul.addr %s178, 24
        %s180 = scalar_lea.vmem [#allocation7], %s179
        %s181 = smul.u32 3, %s20
        %s182 = ssub.s32 13, %s181
        %p183 = scmp.lt.s32.totalorder %s182, 3
        %s184 = scalar_select %p183, %s182, 3
        %s185 = smul.u32 128, %s184
        %s186 = smul.u32 3, %s20
        %s187 = ssub.s32 13, %s186
        %p188 = scmp.lt.s32.totalorder %s187, 3
        %s189 = scalar_select %p188, %s187, 3
        %s190 = smul.u32 128, %s189
        %v191 = vld [vmem:[%s156] sm:$0xff]
        %v192 = vld [vmem:[%s156 + $0x8] sm:$0xff]
        %v193 = vld [vmem:[%s156 + $0x10] sm:$0xff]
        %v194 = vld [vmem:[#allocation5] sm:$0x1]
        %v195 = vld [vmem:[#allocation5 + $0x1] sm:$0x1]
        %v196 = vld [vmem:[#allocation5 + $0x2] sm:$0x1]
        %v197 = vlaneseq
        %v198 = vshrl.u32 %v197, 7
        %v199 = vsub.s32 0, %v198
        %v200 = vrot.slane %v194, %v199
        %v201 = vmul.f32 %v191, %v200
        %v202 = vmul.f32 %v192, %v200
        %v203 = vmul.f32 %v193, %v200
        %v204 = vlaneseq
        %v205 = vshrl.u32 %v204, 7
        %v206 = vsub.s32 0, %v205
        %v207 = vrot.slane %v195, %v206
        %v208 = vadd.f32 %v201, %v207
        %v209 = vadd.f32 %v202, %v207
        %v210 = vadd.f32 %v203, %v207
        %vm211 = vcmp.gt.f32.partialorder %v208, 0.0
        %vm212 = vcmp.gt.f32.partialorder %v209, 0.0
        %vm213 = vcmp.gt.f32.partialorder %v210, 0.0
        %v214 = vlaneseq
        %v215 = vshrl.u32 %v214, 7
        %v216 = vsub.s32 0, %v215
        %v217 = vrot.slane %v196, %v216
        %v218 = vmul.f32 %v217, %v208
        %v219 = vmul.f32 %v217, %v209
        %v220 = vmul.f32 %v217, %v210
        %v221 = vsel %vm211, %v208, %v218
        %v222 = vsel %vm212, %v209, %v219
        %v223 = vsel %vm213, %v210, %v220
        %224 = vst [vmem:[%s180] sm:$0xff] %v221
        %225 = vst [vmem:[%s180 + $0x8] sm:$0xff] %v222
        %226 = vst [vmem:[%s180 + $0x10] sm:$0xff] %v223
        %s227 = sand.u32 %s75, 1
        %s228 = scalar_lea.sflag [#allocation4], %s227
        %s229 = sand.u32 %s75, 1
        %s230 = smul.addr %s229, 24
        %s231 = scalar_lea.vmem [#allocation7], %s230
        // Predicated region
        $region37: #{tpu_custom_call.1} parent=27 // pred_check
          %p232 = pneg %p85
        $region38: #{tpu_custom_call.1} parent=27 // pred_check_branch
          %234 = sbr.rel (%p232) target = $region40
        $region39: #{tpu_custom_call.1} parent=27 // pred_region
          %s235 = smul.u32 3, %s20
          %s236 = ssub.s32 13, %s235
          %p237 = scmp.lt.s32.totalorder %s236, 3
          %s238 = scalar_select %p237, %s236, 3
          %s239 = smul.u32 128, %s238
          %s241 = ssub.s32 384, %s239
          %242 = vsyncadd %s228, %s241
          %p243 = scmp.ne.s32.totalorder 0, %s239
          %s244 = smul.addr %s235, 128
          %s245 = scalar_lea.hbm %s2, %s244
          %s246 = smul.u32 8, %s238
          %s247 = sshll.u32 %s231, 4
          %s248 = int_to_ptr.vmem [resolvable:$true] %s247
          %s249 = sshll.u32 %s246, 4
          %253 = dma.vmem_to_hbm [thread:$0]  (%p243), %s248, %s249, %s245, %s228, 128, 128, 8
        $region40: #{tpu_custom_call.1} parent=27 // pred_fallthru
          _
      $region28: #{tpu_custom_call.1} parent=5 // pred_fallthru
        _
      %p254 = scmp.le.s32.totalorder 2, %s15
      // Predicated region
      $region41: #{tpu_custom_call.1} parent=5 // pred_check
        %p255 = pneg %p254
      $region42: #{tpu_custom_call.1} parent=5 // pred_check_branch
        %257 = sbr.rel (%p255) target = $region44
      $region43: #{tpu_custom_call.1} parent=5 // pred_region
        %s258 = ssub.s32 %s15, 2
        // Predicated region
        $region45: #{tpu_custom_call.1} parent=43 // pred_check
          %p259 = pneg %p91
        $region46: #{tpu_custom_call.1} parent=43 // pred_check_branch
          %261 = sbr.rel (%p259) target = $region48
        $region47: #{tpu_custom_call.1} parent=43 // pred_region
          %s262 = sand.u32 %s76, 1
          %s263 = scalar_lea.sflag [#allocation4], %s262
          %s264 = sand.u32 %s76, 1
          %s265 = smul.addr %s264, 24
          %s266 = scalar_lea.vmem [#allocation7], %s265
          %267 = dma.done %s263, 384
        $region48: #{tpu_custom_call.1} parent=43 // pred_fallthru
          _
      $region44: #{tpu_custom_call.1} parent=5 // pred_fallthru
        _
    $region6: #{tpu_custom_call.1} parent=1 // loop_footer
      %s19 = sadd.s32 1, %s15
    $region7: #{tpu_custom_call.1} parent=1 // loop_footer_branch
      %14 = sbr.rel target = $region3
    $region8: #{tpu_custom_call.1} parent=1 // loop_exit
      _
    %268 = vsyncpa [#allocation3], 1
    %s269 = scalar_lea.sflag [#allocation3], 1
    %270 = vsyncpa %s269, 1
    %271 = vsyncpa [#allocation6], 1
    %272 = vsyncpa [#allocation4], 1
    %s273 = scalar_lea.sflag [#allocation4], 1
    %274 = vsyncpa %s273, 1

</llo_original>
